<compile_context>
chip_gen: v7x
topology: tpu7x:2x2x1
jax: 0.10.0
libtpu: 0.0.40
codegen_flags: <defaults>
</compile_context>

<pallas_src>
import math

import jax
import jax.numpy as jnp
from jax.experimental import pallas as pl
from jax.experimental.pallas import tpu as pltpu

SRC_RANK = 2
GROUP = [0, 1, 2, 3]
WORLD = len(GROUP)


def _broadcast_kernel(src_ref, out_ref):
    # src_ref: (tr, tc) tile of the SOURCE rank's payload (rank dim squeezed).
    # out_ref: (world, tr, tc) — the same tile for every destination rank.
    # Single broadcast store: read the tile once, write all `world` copies.
    out_ref[...] = jnp.broadcast_to(src_ref[...], out_ref.shape)


def _device_kind() -> str:
    try:
        return jax.devices()[0].device_kind.lower()
    except Exception:
        return ""


def pallas_broadcast(x_world: jax.Array, src: int = SRC_RANK) -> jax.Array:
    """Simulated 4-rank broadcast.

    x_world: (WORLD, *shape) per-rank local tensors.
    Returns (WORLD, *shape) where out[r] == x_world[src] for every rank r,
    i.e. what each rank observes after funcol.broadcast(x, src, group).
    """
    world = x_world.shape[0]
    per_rank_shape = x_world.shape[1:]
    dtype = x_world.dtype
    itemsize = jnp.dtype(dtype).itemsize
    n = math.prod(per_rank_shape)

    # --- contiguous (free) 3-D view of the stacked payload ------------------
    if n % 128 == 0:
        rows, cols = n // 128, 128       # lane-dense slab
    else:
        rows, cols = 1, n                # ragged: single-sublane view; partial
                                         # trailing lane block is masked by
                                         # Pallas (no pad / slice in wrapper).
    slab = x_world.reshape(world, rows, cols)

    # --- generation / dtype aware tile sizes --------------------------------
    # Double-buffered VMEM footprint ~= 2*(1+world)*tr*128*itemsize:
    #   tr=4096 (f32, world=4) -> ~21 MiB  (32 MiB scoped default, v6e/v7x)
    #   tr=2048 (f32, world=4) -> ~10 MiB  (16 MiB scoped default, v5e)
    kind = _device_kind()
    newer_gen = ("v6" in kind) or ("v7" in kind) or ("tpu7" in kind)
    two_core = ("v7" in kind) or ("tpu7" in kind)
    base_tr = 4096 if newer_gen else 2048
    tr_cap = max(8, (base_tr * 4) // max(1, itemsize))   # more rows for bf16/i8

    if rows > 1:
        tr, tc = (rows if rows <= tr_cap else tr_cap), 128
        # v7x has 2 TensorCores: make sure a large payload yields >= 2 row
        # tiles so the "parallel" grid axis shards across both cores.
        if two_core and rows >= 2048 and pl.cdiv(rows, tr) < 2:
            half = pl.cdiv(rows, 2)
            tr = pl.cdiv(half, 8) * 8
        grid = (pl.cdiv(rows, tr),)
        in_index = lambda t: (src, t, 0)
        out_index = lambda t: (0, t, 0)
    else:
        # Ragged path: tile the lane axis.  A (1, tc) VMEM block pads to 8
        # sublanes, so budget tc accordingly (same bytes as tr_cap dense rows).
        tr = 1
        tc_cap = max(128, (tr_cap * 128) // 8)
        tc = cols if cols <= tc_cap else (tc_cap // 128) * 128
        grid = (pl.cdiv(cols, tc),)
        in_index = lambda t: (src, 0, t)
        out_index = lambda t: (0, 0, t)

    out = pl.pallas_call(
        _broadcast_kernel,
        out_shape=jax.ShapeDtypeStruct((world, rows, cols), dtype),
        grid=grid,
        in_specs=[
            # Read ONLY the source rank's blocks straight out of the full
            # (world, R, C) array — no wrapper-side x_world[src] copy.
            pl.BlockSpec((pl.Squeezed(), tr, tc), in_index),
        ],
        out_specs=pl.BlockSpec((world, tr, tc), out_index),
        compiler_params=pltpu.CompilerParams(
            dimension_semantics=("parallel",),
        ),
        cost_estimate=pl.CostEstimate(
            flops=0,
            transcendentals=0,
            bytes_accessed=(1 + world) * n * itemsize,
        ),
    )(slab)

    return out.reshape(world, *per_rank_shape)


if __name__ == "__main__":
    # Per-rank local inputs: distinct data per rank so the broadcast is
    # observable.  Per-rank x layout: NCHW, small shape (2, 4, 16, 16), f32.
    key = jax.random.PRNGKey(0)
    x_world = jax.random.normal(key, (WORLD, 2, 4, 16, 16), dtype=jnp.float32)

    result = jax.block_until_ready(pallas_broadcast(x_world, SRC_RANK))

    # Check: every rank's output equals rank SRC_RANK's input.
    expected = jnp.broadcast_to(x_world[SRC_RANK][None], x_world.shape)
    assert result.shape == x_world.shape
    assert result.dtype == x_world.dtype
    assert bool(jnp.array_equal(result, expected))

    print("KERNEL_OK")
</pallas_src>

<mosaic_0001>
module attributes {stable_mosaic.version = 11 : i64} {
  func.func @_broadcast_kernel(%arg0: i32, %arg1: memref<1x16x128xf32, #tpu.memory_space<vmem>>, %arg2: memref<4x16x128xf32, #tpu.memory_space<vmem>>) attributes {dimension_semantics = [#tpu.dimension_semantics<parallel>], iteration_bounds = array<i64: 1>, scalar_prefetch = 0 : i64, scratch_operands = 0 : i64, tpu.core_type = #tpu.core_type<tc>, window_params = [{transform_indices = @transform_0, window_bounds = array<i64: 1, 16, 128>}, {transform_indices = @transform_1, window_bounds = array<i64: 4, 16, 128>}]} {
    %c0 = arith.constant 0 : index
    %c0_0 = arith.constant 0 : index
    %c0_1 = arith.constant 0 : index
    %0 = vector.load %arg1[%c0, %c0_0, %c0_1] : memref<1x16x128xf32, #tpu.memory_space<vmem>>, vector<1x16x128xf32>
    %1 = vector.shape_cast %0 : vector<1x16x128xf32> to vector<16x128xf32>
    %2 = vector.shape_cast %1 : vector<16x128xf32> to vector<1x16x128xf32>
    %3 = vector.broadcast %2 : vector<1x16x128xf32> to vector<4x16x128xf32>
    %c0_2 = arith.constant 0 : index
    %c0_3 = arith.constant 0 : index
    %c0_4 = arith.constant 0 : index
    %4 = vector.load %arg2[%c0_2, %c0_3, %c0_4] : memref<4x16x128xf32, #tpu.memory_space<vmem>>, vector<4x16x128xf32>
    tpu.vector_store %arg2[%c0_2, %c0_3, %c0_4], %3 {strides = array<i32>} : memref<4x16x128xf32, #tpu.memory_space<vmem>>, vector<4x16x128xf32>,
    return
  }
  func.func @transform_0(%arg0: i32) -> (i32, i32, i32) {
    %c2_i32 = arith.constant 2 : i32
    %c0_i32 = arith.constant 0 : i32
    %c0_i32_0 = arith.constant 0 : i32
    return %c2_i32, %arg0, %c0_i32 : i32, i32, i32
  }
  func.func @transform_1(%arg0: i32) -> (i32, i32, i32) {
    %c0_i32 = arith.constant 0 : i32
    %c0_i32_0 = arith.constant 0 : i32
    %c0_i32_1 = arith.constant 0 : i32
    return %c0_i32, %arg0, %c0_i32_0 : i32, i32, i32
  }
}

</mosaic_0001>

<llo_original>
// kernel: tpu_custom_call.1
$region0: #{tpu_custom_call.1}
  #allocation0 [shape = 'u32[]', space=smem, size = 0x4, offset = 0x4, fixed_abs, tag = 'smem constant byte address 0x4 - core index']
  #allocation1 [shape = 'u32[144,128]{1,0:T(1,128)}', space=vmem, size = 0x12000, scoped, tag = 'internal scratch']
  %s0 = inlined_call_operand.hbm [shape: f32[4,16,128], index: 0, kind: input, shape index: {}]
  %s1 = inlined_call_operand.hbm [shape: f32[4,16,128], index: 1, kind: output, shape index: {}]
  %s2 = sld [smem:[#allocation0]]
  $region18: #{tpu_custom_call.1} parent=0
    _
  %s4 = ssub.s32 1, %s2
  %s5 = scalar_select 0, %s4, %s2
  $region1: #{tpu_custom_call.1} parent=0
    #allocation2 [shape = 'u8[8192]{0}', space=vmem, size = 0x2000, scoped, tag = 'input window, operand 0, single buffered']
    #allocation3 [shape = 's32[1]{0}', space=sflag, size = 0x4, scoped, tag = 'scoped memory for tpu_custom_call.1']
    #allocation4 [shape = 's32[1]{0}', space=sflag, size = 0x4, scoped, tag = 'scoped memory for tpu_custom_call.1']
    #allocation5 [shape = 'u8[32768]{0}', space=vmem, size = 0x8000, scoped, tag = 'output window, operand 0, single buffered']
    %6 = vsyncpa [#allocation3], 0
    %7 = vsyncpa [#allocation4], 0
    // Predicated region
    $region2: #{tpu_custom_call.1} parent=1 // pred_check
      _
    $region3: #{tpu_custom_call.1} parent=1 // pred_check_branch
      %9 = sbr.rel (0) target = $region5
    $region4: #{tpu_custom_call.1} parent=1 // pred_region
      %s11 = ssub.s32 256, 256
      %12 = vsyncadd [#allocation3], %s11
      %s13 = scalar_lea.hbm %s0, 512
      %s14 = sshll.u32 [#allocation2], 4
      %s15 = int_to_ptr.vmem [resolvable:$true] %s14
      %20 = dma.hbm_to_vmem [thread:$0]  %s13, 256, %s15, [#allocation3], 128, 128, 8
    $region5: #{tpu_custom_call.1} parent=1 // pred_fallthru
      _
    // Predicated region
    $region6: #{tpu_custom_call.1} parent=1 // pred_check
      _
    $region7: #{tpu_custom_call.1} parent=1 // pred_check_branch
      %22 = sbr.rel (0) target = $region9
    $region8: #{tpu_custom_call.1} parent=1 // pred_region
      %23 = dma.done [#allocation3], 256
    $region9: #{tpu_custom_call.1} parent=1 // pred_fallthru
      _
    %v24 = vld [vmem:[#allocation2] sm:$0xff]
    %v25 = vld [vmem:[#allocation2 + $0x8] sm:$0xff]
    %26 = vst [vmem:[#allocation5] sm:$0xff] %v24
    %27 = vst [vmem:[#allocation5 + $0x8] sm:$0xff] %v25
    %28 = vst [vmem:[#allocation5 + $0x10] sm:$0xff] %v24
    %29 = vst [vmem:[#allocation5 + $0x18] sm:$0xff] %v25
    %30 = vst [vmem:[#allocation5 + $0x20] sm:$0xff] %v24
    %31 = vst [vmem:[#allocation5 + $0x28] sm:$0xff] %v25
    %32 = vst [vmem:[#allocation5 + $0x30] sm:$0xff] %v24
    %33 = vst [vmem:[#allocation5 + $0x38] sm:$0xff] %v25
    // Predicated region
    $region10: #{tpu_custom_call.1} parent=1 // pred_check
      _
    $region11: #{tpu_custom_call.1} parent=1 // pred_check_branch
      %35 = sbr.rel (0) target = $region13
    $region12: #{tpu_custom_call.1} parent=1 // pred_region
      %s37 = ssub.s32 1024, 1024
      %38 = vsyncadd [#allocation4], %s37
      %s39 = sshll.u32 [#allocation5], 4
      %s40 = int_to_ptr.vmem [resolvable:$true] %s39
      %45 = dma.vmem_to_hbm [thread:$0]  %s40, 1024, %s1, [#allocation4], 128, 128, 8
    $region13: #{tpu_custom_call.1} parent=1 // pred_fallthru
      _
    // Predicated region
    $region14: #{tpu_custom_call.1} parent=1 // pred_check
      _
    $region15: #{tpu_custom_call.1} parent=1 // pred_check_branch
      %47 = sbr.rel (0) target = $region17
    $region16: #{tpu_custom_call.1} parent=1 // pred_region
      %48 = dma.done [#allocation4], 1024
    $region17: #{tpu_custom_call.1} parent=1 // pred_fallthru
      _
    %49 = vsyncpa [#allocation3], 1
    %50 = vsyncpa [#allocation4], 1

</llo_original>
